<compile_context>
chip_gen: v6e
topology: v6e:2x2x1
jax: 0.10.0
libtpu: 0.0.40
codegen_flags: <defaults>
</compile_context>

<pallas_src>
import functools

import jax
import jax.numpy as jnp
from jax import lax
from jax.experimental import pallas as pl
from jax.experimental.pallas import tpu as pltpu


def _fa_kernel(c_row_ref, c_col_ref, psi_ref, o_ref):
    # c_row_ref: (T, K)  VMEM   rows i*T : (i+1)*T of C
    # c_col_ref: (T, K)  VMEM   rows j*T : (j+1)*T of C
    # psi_ref:   (T, 1)  VMEM   exp(logpsi_diag + logvar) for rows of this tile
    # o_ref:     (T, T)  VMEM   output tile (i, j)
    cov = lax.dot_general(
        c_row_ref[...],
        c_col_ref[...],
        dimension_numbers=(((1,), (1,)), ((), ())),  # contract latent axis; no .T copy
        preferred_element_type=jnp.float32,
    )
    o_ref[...] = cov.astype(o_ref.dtype)

    # Only diagonal tiles (i == j, and T_M == T_N) carry the psi diagonal.
    @pl.when(pl.program_id(0) == pl.program_id(1))
    def _():
        t_m, t_n = o_ref.shape
        row = lax.broadcasted_iota(jnp.int32, (t_m, t_n), 0)
        col = lax.broadcasted_iota(jnp.int32, (t_m, t_n), 1)
        psi = psi_ref[...]  # (T, 1) broadcasts along columns
        o_ref[...] = o_ref[...] + jnp.where(row == col, psi, jnp.float32(0.0))


@functools.partial(jax.jit, static_argnames=("tile",))
def fa_decomposition_forward(C, logpsi_diag, logvar, *, tile=512):
    """Pallas wrapper replicating FADecomposition.forward().

    C:           (d_neurons, d_latent) f32
    logpsi_diag: (d_neurons,)          f32
    logvar:      (1,)                  f32
    returns:     (d_neurons, d_neurons) f32
    """
    d_neurons, d_latent = C.shape

    # Glue math (cheap elementwise on a vector): psi diagonal values.
    psi_vec = jnp.exp(logpsi_diag + logvar).astype(jnp.float32)

    # Pad the neuron dim to a multiple of 128 -> lane-dense, unmasked output
    # stores.  Padded C rows are zero and padded psi entries are zero, so the
    # padded region of the covariance is zero and is sliced away below.
    n_pad = pl.cdiv(d_neurons, 128) * 128
    # Tile size: use `tile` when it evenly divides n_pad, else fall back to 128
    # (always divides since n_pad is a multiple of 128).  T_M == T_N keeps the
    # tile-relative diagonal mask correct on i == j tiles.
    t = tile if (n_pad % tile == 0) else 128

    C_pad = jnp.zeros((n_pad, d_latent), jnp.float32).at[:d_neurons, :].set(
        C.astype(jnp.float32)
    )
    psi_pad = jnp.zeros((n_pad, 1), jnp.float32).at[:d_neurons, 0].set(psi_vec)

    grid = (n_pad // t, n_pad // t)  # j (axis 1) is the inner / fastest axis

    out = pl.pallas_call(
        _fa_kernel,
        out_shape=jax.ShapeDtypeStruct((n_pad, n_pad), jnp.float32),
        grid=grid,
        in_specs=[
            pl.BlockSpec((t, d_latent), lambda i, j: (i, 0)),  # row tile: resident over j
            pl.BlockSpec((t, d_latent), lambda i, j: (j, 0)),  # col tile: small per-step DMA
            pl.BlockSpec((t, 1), lambda i, j: (i, 0)),         # psi for the row tile
        ],
        out_specs=pl.BlockSpec((t, t), lambda i, j: (i, j)),
        compiler_params=pltpu.CompilerParams(
            dimension_semantics=("parallel", "parallel"),
            vmem_limit_bytes=32 * 1024 * 1024,
        ),
    )(C_pad, C_pad, psi_pad)

    return out[:d_neurons, :d_neurons]


if __name__ == "__main__":
    # Small shapes consistent with the module: d_neurons=32, d_latent=8.
    d_neurons, d_latent = 32, 8

    key = jax.random.PRNGKey(0)
    # torch.rand(d_neurons, d_latent) * 0.1  ->  uniform[0, 0.1)
    C = jax.random.uniform(key, (d_neurons, d_latent), dtype=jnp.float32) * 0.1
    # psi_diag_same_variance=True: logpsi_diag = zeros(d_neurons), logvar = zeros(1)
    logpsi_diag = jnp.zeros((d_neurons,), dtype=jnp.float32)
    logvar = jnp.zeros((1,), dtype=jnp.float32)

    out = fa_decomposition_forward(C, logpsi_diag, logvar)
    out = jax.block_until_ready(out)

    # Pure-JAX reference check.
    ref = C @ C.T + jnp.diag(jnp.exp(logpsi_diag + logvar[0]))
    assert out.shape == (d_neurons, d_neurons)
    assert jnp.allclose(out, ref, atol=1e-5, rtol=1e-5), "mismatch vs reference"

    # Also sanity-check a larger, multi-tile shape (exercises the 2-D grid,
    # diag-gating, and the off-diagonal fast path).
    dn2, dl2 = 384, 16
    k2 = jax.random.PRNGKey(1)
    C2 = jax.random.uniform(k2, (dn2, dl2), dtype=jnp.float32) * 0.1
    lp2 = jnp.zeros((dn2,), dtype=jnp.float32)
    lv2 = jnp.zeros((1,), dtype=jnp.float32)
    out2 = jax.block_until_ready(fa_decomposition_forward(C2, lp2, lv2, tile=128))
    ref2 = C2 @ C2.T + jnp.diag(jnp.exp(lp2 + lv2[0]))
    assert jnp.allclose(out2, ref2, atol=1e-5, rtol=1e-5), "mismatch (multi-tile)"

    print("KERNEL_OK")
</pallas_src>

<mosaic_0001>
module attributes {stable_mosaic.version = 11 : i64} {
  func.func @_fa_kernel(%arg0: i32, %arg1: i32, %arg2: memref<128x8xf32, #tpu.memory_space<vmem>>, %arg3: memref<128x8xf32, #tpu.memory_space<vmem>>, %arg4: memref<128x1xf32, #tpu.memory_space<vmem>>, %arg5: memref<128x128xf32, #tpu.memory_space<vmem>>) attributes {dimension_semantics = [#tpu.dimension_semantics<parallel>, #tpu.dimension_semantics<parallel>], iteration_bounds = array<i64: 1, 1>, scalar_prefetch = 0 : i64, scratch_operands = 0 : i64, tpu.core_type = #tpu.core_type<tc>, window_params = [{transform_indices = @transform_0, window_bounds = array<i64: 128, 8>}, {transform_indices = @transform_1, window_bounds = array<i64: 128, 8>}, {transform_indices = @transform_2, window_bounds = array<i64: 128, 1>}, {transform_indices = @transform_3, window_bounds = array<i64: 128, 128>}]} {
    %c0 = arith.constant 0 : index
    %c0_0 = arith.constant 0 : index
    %0 = vector.load %arg2[%c0, %c0_0] : memref<128x8xf32, #tpu.memory_space<vmem>>, vector<128x8xf32>
    %c0_1 = arith.constant 0 : index
    %c0_2 = arith.constant 0 : index
    %1 = vector.load %arg3[%c0_1, %c0_2] : memref<128x8xf32, #tpu.memory_space<vmem>>, vector<128x8xf32>
    %cst = arith.constant dense<0.000000e+00> : vector<128x128xf32>
    %2 = tpu.matmul %0, %1, %cst {dimension_numbers = #tpu.dot_dimension_numbers<[1], [1], [0], [0], [0, 0, 1, 0], [], []>} : vector<128x8xf32>, vector<128x8xf32>, vector<128x128xf32> -> vector<128x128xf32>
    %c0_3 = arith.constant 0 : index
    %c0_4 = arith.constant 0 : index
    %3 = vector.load %arg5[%c0_3, %c0_4] : memref<128x128xf32, #tpu.memory_space<vmem>>, vector<128x128xf32>
    tpu.vector_store %arg5[%c0_3, %c0_4], %2 {strides = array<i32>} : memref<128x128xf32, #tpu.memory_space<vmem>>, vector<128x128xf32>,
    %4 = arith.cmpi eq, %arg0, %arg1 : i32
    %5 = arith.extui %4 : i1 to i32
    %c0_i32 = arith.constant 0 : i32
    %6 = arith.cmpi ne, %5, %c0_i32 : i32
    scf.if %6 {
      %7 = tpu.iota {dimensions = array<i32: 0>} : vector<128x128xi32>
      %8 = tpu.iota {dimensions = array<i32: 1>} : vector<128x128xi32>
      %c0_5 = arith.constant 0 : index
      %c0_6 = arith.constant 0 : index
      %9 = vector.load %arg4[%c0_5, %c0_6] : memref<128x1xf32, #tpu.memory_space<vmem>>, vector<128x1xf32>
      %c0_7 = arith.constant 0 : index
      %c0_8 = arith.constant 0 : index
      %10 = vector.load %arg5[%c0_7, %c0_8] : memref<128x128xf32, #tpu.memory_space<vmem>>, vector<128x128xf32>
      %11 = arith.cmpi eq, %7, %8 : vector<128x128xi32>
      %cst_9 = arith.constant 0.000000e+00 : f32
      %12 = vector.shape_cast %9 : vector<128x1xf32> to vector<128x1xf32>
      %13 = vector.broadcast %12 : vector<128x1xf32> to vector<128x128xf32>
      %14 = vector.broadcast %cst_9 : f32 to vector<128x128xf32>
      %15 = arith.select %11, %13, %14 : vector<128x128xi1>, vector<128x128xf32>
      %16 = arith.addf %10, %15 : vector<128x128xf32>
      %c0_10 = arith.constant 0 : index
      %c0_11 = arith.constant 0 : index
      %17 = vector.load %arg5[%c0_10, %c0_11] : memref<128x128xf32, #tpu.memory_space<vmem>>, vector<128x128xf32>
      tpu.vector_store %arg5[%c0_10, %c0_11], %16 {strides = array<i32>} : memref<128x128xf32, #tpu.memory_space<vmem>>, vector<128x128xf32>,
    } else {
    }
    return
  }
  func.func @transform_0(%arg0: i32, %arg1: i32) -> (i32, i32) {
    %c0_i32 = arith.constant 0 : i32
    %c0_i32_0 = arith.constant 0 : i32
    return %arg0, %c0_i32 : i32, i32
  }
  func.func @transform_1(%arg0: i32, %arg1: i32) -> (i32, i32) {
    %c0_i32 = arith.constant 0 : i32
    %c0_i32_0 = arith.constant 0 : i32
    return %arg1, %c0_i32 : i32, i32
  }
  func.func @transform_2(%arg0: i32, %arg1: i32) -> (i32, i32) {
    %c0_i32 = arith.constant 0 : i32
    %c0_i32_0 = arith.constant 0 : i32
    return %arg0, %c0_i32 : i32, i32
  }
  func.func @transform_3(%arg0: i32, %arg1: i32) -> (i32, i32) {
    %c0_i32 = arith.constant 0 : i32
    return %arg0, %arg1 : i32, i32
  }
}

</mosaic_0001>

<llo_original>
// kernel: fa_decomposition_forward.1
$region0: #{fa_decomposition_forward.1}
  #allocation0 [shape = 'u32[]', space=smem, size = 0x4, offset = 0x4, fixed_abs, tag = 'smem constant byte address 0x4 - core index']
  #allocation1 [shape = 'u32[144,128]{1,0:T(1,128)}', space=vmem, size = 0x12000, scoped, tag = 'internal scratch']
  %s0 = inlined_call_operand.vmem [shape: f32[128,8], index: 0, kind: input, shape index: {}, may-alias: {0,1}]
  %s1 = inlined_call_operand.vmem [shape: f32[128,8], index: 1, kind: input, shape index: {}, may-alias: {0,1}]
  %s2 = inlined_call_operand.vmem [shape: f32[128,1], index: 2, kind: input, shape index: {}]
  %s3 = inlined_call_operand.vmem [shape: f32[128,128], index: 3, kind: output, shape index: {}]
  %s4 = sld [smem:[#allocation0]]
  $region26: #{fa_decomposition_forward.1} parent=0
    _
  %s6 = ssub.s32 1, %s4
  %s7 = scalar_select 0, %s6, %s4
  // Predicated region
  $region2: #{fa_decomposition_forward.1} parent=0 // pred_check
    _
  $region3: #{fa_decomposition_forward.1} parent=0 // pred_check_branch
    %9 = sbr.rel (0) target = $region5
  $region4: #{fa_decomposition_forward.1} parent=0 // pred_region
    _
  $region5: #{fa_decomposition_forward.1} parent=0 // pred_fallthru
    _
  // Predicated region
  $region6: #{fa_decomposition_forward.1} parent=0 // pred_check
    _
  $region7: #{fa_decomposition_forward.1} parent=0 // pred_check_branch
    %11 = sbr.rel (0) target = $region9
  $region8: #{fa_decomposition_forward.1} parent=0 // pred_region
    _
  $region9: #{fa_decomposition_forward.1} parent=0 // pred_fallthru
    _
  // Predicated region
  $region10: #{fa_decomposition_forward.1} parent=0 // pred_check
    _
  $region11: #{fa_decomposition_forward.1} parent=0 // pred_check_branch
    %13 = sbr.rel (0) target = $region13
  $region12: #{fa_decomposition_forward.1} parent=0 // pred_region
    _
  $region13: #{fa_decomposition_forward.1} parent=0 // pred_fallthru
    _
  %v14 = vld [vmem:[%s0] sm:$0xff]
  %v15 = vld [vmem:[%s0 + $0x8] sm:$0xff]
  %v16 = vld [vmem:[%s0 + $0x10] sm:$0xff]
  %v17 = vld [vmem:[%s0 + $0x18] sm:$0xff]
  %v18 = vld [vmem:[%s0 + $0x20] sm:$0xff]
  %v19 = vld [vmem:[%s0 + $0x28] sm:$0xff]
  %v20 = vld [vmem:[%s0 + $0x30] sm:$0xff]
  %v21 = vld [vmem:[%s0 + $0x38] sm:$0xff]
  %v22 = vld [vmem:[%s0 + $0x40] sm:$0xff]
  %v23 = vld [vmem:[%s0 + $0x48] sm:$0xff]
  %v24 = vld [vmem:[%s0 + $0x50] sm:$0xff]
  %v25 = vld [vmem:[%s0 + $0x58] sm:$0xff]
  %v26 = vld [vmem:[%s0 + $0x60] sm:$0xff]
  %v27 = vld [vmem:[%s0 + $0x68] sm:$0xff]
  %v28 = vld [vmem:[%s0 + $0x70] sm:$0xff]
  %v29 = vld [vmem:[%s0 + $0x78] sm:$0xff]
  %v30 = vld [vmem:[%s1] sm:$0xff]
  %v31 = vld [vmem:[%s1 + $0x8] sm:$0xff]
  %v32 = vld [vmem:[%s1 + $0x10] sm:$0xff]
  %v33 = vld [vmem:[%s1 + $0x18] sm:$0xff]
  %v34 = vld [vmem:[%s1 + $0x20] sm:$0xff]
  %v35 = vld [vmem:[%s1 + $0x28] sm:$0xff]
  %v36 = vld [vmem:[%s1 + $0x30] sm:$0xff]
  %v37 = vld [vmem:[%s1 + $0x38] sm:$0xff]
  %v38 = vld [vmem:[%s1 + $0x40] sm:$0xff]
  %v39 = vld [vmem:[%s1 + $0x48] sm:$0xff]
  %v40 = vld [vmem:[%s1 + $0x50] sm:$0xff]
  %v41 = vld [vmem:[%s1 + $0x58] sm:$0xff]
  %v42 = vld [vmem:[%s1 + $0x60] sm:$0xff]
  %v43 = vld [vmem:[%s1 + $0x68] sm:$0xff]
  %v44 = vld [vmem:[%s1 + $0x70] sm:$0xff]
  %v45 = vld [vmem:[%s1 + $0x78] sm:$0xff]
  %vm46 = vcmask 64512
  %v48 = vsel %vm46, %v14, 0
  %v51 = vsel %vm46, %v15, 0
  %v54 = vsel %vm46, %v16, 0
  %v57 = vsel %vm46, %v17, 0
  %v60 = vsel %vm46, %v18, 0
  %v63 = vsel %vm46, %v19, 0
  %v66 = vsel %vm46, %v20, 0
  %v69 = vsel %vm46, %v21, 0
  %v72 = vsel %vm46, %v22, 0
  %v75 = vsel %vm46, %v23, 0
  %v78 = vsel %vm46, %v24, 0
  %v81 = vsel %vm46, %v25, 0
  %v84 = vsel %vm46, %v26, 0
  %v87 = vsel %vm46, %v27, 0
  %v90 = vsel %vm46, %v28, 0
  %v93 = vsel %vm46, %v29, 0
  %v96 = vsel %vm46, %v30, 0
  %v99 = vsel %vm46, %v31, 0
  %v102 = vsel %vm46, %v32, 0
  %v105 = vsel %vm46, %v33, 0
  %v108 = vsel %vm46, %v34, 0
  %v111 = vsel %vm46, %v35, 0
  %v114 = vsel %vm46, %v36, 0
  %v117 = vsel %vm46, %v37, 0
  %v120 = vsel %vm46, %v38, 0
  %v123 = vsel %vm46, %v39, 0
  %v126 = vsel %vm46, %v40, 0
  %v129 = vsel %vm46, %v41, 0
  %v132 = vsel %vm46, %v42, 0
  %v135 = vsel %vm46, %v43, 0
  %v138 = vsel %vm46, %v44, 0
  %v141 = vsel %vm46, %v45, 0
  %143 = vmatprep.subr.mxu0 0.0
  %144 = vmatpush1.xpose.msra.mxu0 %v141
  %145 = vmatprep.subr.mxu0 0.0
  %146 = vmatpush1.xpose.msra.mxu0 %v138
  %147 = vmatprep.subr.mxu0 0.0
  %148 = vmatpush1.xpose.msra.mxu0 %v135
  %149 = vmatprep.subr.mxu0 0.0
  %150 = vmatpush1.xpose.msra.mxu0 %v132
  %151 = vmatprep.subr.mxu0 0.0
  %152 = vmatpush1.xpose.msra.mxu0 %v129
  %153 = vmatprep.subr.mxu0 0.0
  %154 = vmatpush1.xpose.msra.mxu0 %v126
  %155 = vmatprep.subr.mxu0 0.0
  %156 = vmatpush1.xpose.msra.mxu0 %v123
  %157 = vmatprep.subr.mxu0 0.0
  %158 = vmatpush1.xpose.msra.mxu0 %v120
  %159 = vmatprep.subr.mxu0 0.0
  %160 = vmatpush1.xpose.msra.mxu0 %v117
  %161 = vmatprep.subr.mxu0 0.0
  %162 = vmatpush1.xpose.msra.mxu0 %v114
  %163 = vmatprep.subr.mxu0 0.0
  %164 = vmatpush1.xpose.msra.mxu0 %v111
  %165 = vmatprep.subr.mxu0 0.0
  %166 = vmatpush1.xpose.msra.mxu0 %v108
  %167 = vmatprep.subr.mxu0 0.0
  %168 = vmatpush1.xpose.msra.mxu0 %v105
  %169 = vmatprep.subr.mxu0 0.0
  %170 = vmatpush1.xpose.msra.mxu0 %v102
  %171 = vmatprep.subr.mxu0 0.0
  %172 = vmatpush1.xpose.msra.mxu0 %v99
  %173 = vmatprep.subr.mxu0 0.0
  %174 = vmatpush1.xpose.msra.mxu0 %v96
  %175 = vmatprep.subr.mxu0 0.0
  %176 = vmatpush2.xpose.msra.mxu0 0.0
  %177 = vmatprep.subr.mxu0 0.0
  %178 = vmatpush2.xpose.msra.mxu0 0.0
  %179 = vmatprep.subr.mxu0 0.0
  %180 = vmatpush2.xpose.msra.mxu0 0.0
  %181 = vmatprep.subr.mxu0 0.0
  %182 = vmatpush2.xpose.msra.mxu0 0.0
  %183 = vmatprep.subr.mxu0 0.0
  %184 = vmatpush2.xpose.msra.mxu0 0.0
  %185 = vmatprep.subr.mxu0 0.0
  %186 = vmatpush2.xpose.msra.mxu0 0.0
  %187 = vmatprep.subr.mxu0 0.0
  %188 = vmatpush2.xpose.msra.mxu0 0.0
  %189 = vmatprep.subr.mxu0 0.0
  %190 = vmatpush2.xpose.msra.mxu0 0.0
  %191 = vmatprep.subr.mxu0 0.0
  %192 = vmatpush2.xpose.msra.mxu0 0.0
  %193 = vmatprep.subr.mxu0 0.0
  %194 = vmatpush2.xpose.msra.mxu0 0.0
  %195 = vmatprep.subr.mxu0 0.0
  %196 = vmatpush2.xpose.msra.mxu0 0.0
  %197 = vmatprep.subr.mxu0 0.0
  %198 = vmatpush2.xpose.msra.mxu0 0.0
  %199 = vmatprep.subr.mxu0 0.0
  %200 = vmatpush2.xpose.msra.mxu0 0.0
  %201 = vmatprep.subr.mxu0 0.0
  %202 = vmatpush2.xpose.msra.mxu0 0.0
  %203 = vmatprep.subr.mxu0 0.0
  %204 = vmatpush2.xpose.msra.mxu0 0.0
  %205 = vmatprep.subr.mxu0 0.0
  %206 = vmatpush2.xpose.msra.mxu0 0.0
  %207 = vmatprep.mubr.f32.mxu0 0.0
  %208 = vmatmul.mubr.f32.gmra.mxu0 %v48
  %v209 = vpop.f32.mrf.mxu0
  %v210 = vadd.f32 0.0, %v209
  %v211 = vpop.f32.mrf.mxu0
  %212 = vmatprep.mubr.f32.mxu0 0.0
  %213 = vmatmul.mubr.f32.gmra.mxu0 %v51
  %v214 = vpop.f32.mrf.mxu0
  %v215 = vadd.f32 0.0, %v214
  %v216 = vpop.f32.mrf.mxu0
  %217 = vmatprep.mubr.f32.mxu0 0.0
  %218 = vmatmul.mubr.f32.gmra.mxu0 %v54
  %v219 = vpop.f32.mrf.mxu0
  %v220 = vadd.f32 0.0, %v219
  %v221 = vpop.f32.mrf.mxu0
  %222 = vmatprep.mubr.f32.mxu0 0.0
  %223 = vmatmul.mubr.f32.gmra.mxu0 %v57
  %v224 = vpop.f32.mrf.mxu0
  %v225 = vadd.f32 0.0, %v224
  %v226 = vpop.f32.mrf.mxu0
  %227 = vmatprep.mubr.f32.mxu0 0.0
  %228 = vmatmul.mubr.f32.gmra.mxu0 %v60
  %v229 = vpop.f32.mrf.mxu0
  %v230 = vadd.f32 0.0, %v229
  %v231 = vpop.f32.mrf.mxu0
  %232 = vmatprep.mubr.f32.mxu0 0.0
  %233 = vmatmul.mubr.f32.gmra.mxu0 %v63
  %v234 = vpop.f32.mrf.mxu0
  %v235 = vadd.f32 0.0, %v234
  %v236 = vpop.f32.mrf.mxu0
  %237 = vmatprep.mubr.f32.mxu0 0.0
  %238 = vmatmul.mubr.f32.gmra.mxu0 %v66
  %v239 = vpop.f32.mrf.mxu0
  %v240 = vadd.f32 0.0, %v239
  %v241 = vpop.f32.mrf.mxu0
  %242 = vmatprep.mubr.f32.mxu0 0.0
  %243 = vmatmul.mubr.f32.gmra.mxu0 %v69
  %v244 = vpop.f32.mrf.mxu0
  %v245 = vadd.f32 0.0, %v244
  %v246 = vpop.f32.mrf.mxu0
  %247 = vmatprep.mubr.f32.mxu0 0.0
  %248 = vmatmul.mubr.f32.gmra.mxu0 %v72
  %v249 = vpop.f32.mrf.mxu0
  %v250 = vadd.f32 0.0, %v249
  %v251 = vpop.f32.mrf.mxu0
  %252 = vmatprep.mubr.f32.mxu0 0.0
  %253 = vmatmul.mubr.f32.gmra.mxu0 %v75
  %v254 = vpop.f32.mrf.mxu0
  %v255 = vadd.f32 0.0, %v254
  %v256 = vpop.f32.mrf.mxu0
  %257 = vmatprep.mubr.f32.mxu0 0.0
  %258 = vmatmul.mubr.f32.gmra.mxu0 %v78
  %v259 = vpop.f32.mrf.mxu0
  %v260 = vadd.f32 0.0, %v259
  %v261 = vpop.f32.mrf.mxu0
  %262 = vmatprep.mubr.f32.mxu0 0.0
  %263 = vmatmul.mubr.f32.gmra.mxu0 %v81
  %v264 = vpop.f32.mrf.mxu0
  %v265 = vadd.f32 0.0, %v264
  %v266 = vpop.f32.mrf.mxu0
  %267 = vmatprep.mubr.f32.mxu0 0.0
  %268 = vmatmul.mubr.f32.gmra.mxu0 %v84
  %v269 = vpop.f32.mrf.mxu0
  %v270 = vadd.f32 0.0, %v269
  %v271 = vpop.f32.mrf.mxu0
  %272 = vmatprep.mubr.f32.mxu0 0.0
  %273 = vmatmul.mubr.f32.gmra.mxu0 %v87
  %v274 = vpop.f32.mrf.mxu0
  %v275 = vadd.f32 0.0, %v274
  %v276 = vpop.f32.mrf.mxu0
  %277 = vmatprep.mubr.f32.mxu0 0.0
  %278 = vmatmul.mubr.f32.gmra.mxu0 %v90
  %v279 = vpop.f32.mrf.mxu0
  %v280 = vadd.f32 0.0, %v279
  %v281 = vpop.f32.mrf.mxu0
  %282 = vmatprep.mubr.f32.mxu0 0.0
  %283 = vmatmul.mubr.f32.gmra.mxu0 %v93
  %v284 = vpop.f32.mrf.mxu0
  %v285 = vadd.f32 0.0, %v284
  %v286 = vpop.f32.mrf.mxu0
  %287 = vdwg.mxu0
  %288 = vst [vmem:[%s3] sm:$0xff] %v210
  %289 = vst [vmem:[%s3 + $0x8] sm:$0xff] %v215
  %290 = vst [vmem:[%s3 + $0x10] sm:$0xff] %v220
  %291 = vst [vmem:[%s3 + $0x18] sm:$0xff] %v225
  %292 = vst [vmem:[%s3 + $0x20] sm:$0xff] %v230
  %293 = vst [vmem:[%s3 + $0x28] sm:$0xff] %v235
  %294 = vst [vmem:[%s3 + $0x30] sm:$0xff] %v240
  %295 = vst [vmem:[%s3 + $0x38] sm:$0xff] %v245
  %296 = vst [vmem:[%s3 + $0x40] sm:$0xff] %v250
  %297 = vst [vmem:[%s3 + $0x48] sm:$0xff] %v255
  %298 = vst [vmem:[%s3 + $0x50] sm:$0xff] %v260
  %299 = vst [vmem:[%s3 + $0x58] sm:$0xff] %v265
  %300 = vst [vmem:[%s3 + $0x60] sm:$0xff] %v270
  %301 = vst [vmem:[%s3 + $0x68] sm:$0xff] %v275
  %302 = vst [vmem:[%s3 + $0x70] sm:$0xff] %v280
  %303 = vst [vmem:[%s3 + $0x78] sm:$0xff] %v285
  %p304 = scmp.eq.s32.totalorder 0, 0
  // Predicated region
  $region14: #{fa_decomposition_forward.1} parent=0 // pred_check
    %p305 = pneg %p304
  $region15: #{fa_decomposition_forward.1} parent=0 // pred_check_branch
    %307 = sbr.rel (%p305) target = $region17
  $region16: #{fa_decomposition_forward.1} parent=0 // pred_region
    %v308 = vlaneseq
    %v309 = vshrl.u32 %v308, 7
    %v310 = vadd.s32 %v309, 8
    %v311 = vadd.s32 %v309, 16
    %v312 = vadd.s32 %v309, 24
    %v313 = vadd.s32 %v309, 32
    %v314 = vadd.s32 %v309, 40
    %v315 = vadd.s32 %v309, 48
    %v316 = vadd.s32 %v309, 56
    %v317 = vadd.s32 %v309, 64
    %v318 = vadd.s32 %v309, 72
    %v319 = vadd.s32 %v309, 80
    %v320 = vadd.s32 %v309, 88
    %v321 = vadd.s32 %v309, 96
    %v322 = vadd.s32 %v309, 104
    %v323 = vadd.s32 %v309, 112
    %v324 = vadd.s32 %v309, 120
    %v325 = vlaneseq
    %v326 = vand.u32 %v325, 127
    %v327 = vld [vmem:[%s2] sm:$0xff]
    %v328 = vld [vmem:[%s2 + $0x8] sm:$0xff]
    %v329 = vld [vmem:[%s2 + $0x10] sm:$0xff]
    %v330 = vld [vmem:[%s2 + $0x18] sm:$0xff]
    %v331 = vld [vmem:[%s2 + $0x20] sm:$0xff]
    %v332 = vld [vmem:[%s2 + $0x28] sm:$0xff]
    %v333 = vld [vmem:[%s2 + $0x30] sm:$0xff]
    %v334 = vld [vmem:[%s2 + $0x38] sm:$0xff]
    %v335 = vld [vmem:[%s2 + $0x40] sm:$0xff]
    %v336 = vld [vmem:[%s2 + $0x48] sm:$0xff]
    %v337 = vld [vmem:[%s2 + $0x50] sm:$0xff]
    %v338 = vld [vmem:[%s2 + $0x58] sm:$0xff]
    %v339 = vld [vmem:[%s2 + $0x60] sm:$0xff]
    %v340 = vld [vmem:[%s2 + $0x68] sm:$0xff]
    %v341 = vld [vmem:[%s2 + $0x70] sm:$0xff]
    %v342 = vld [vmem:[%s2 + $0x78] sm:$0xff]
    %v343 = vld [vmem:[%s3] sm:$0xff]
    %v344 = vld [vmem:[%s3 + $0x8] sm:$0xff]
    %v345 = vld [vmem:[%s3 + $0x10] sm:$0xff]
    %v346 = vld [vmem:[%s3 + $0x18] sm:$0xff]
    %v347 = vld [vmem:[%s3 + $0x20] sm:$0xff]
    %v348 = vld [vmem:[%s3 + $0x28] sm:$0xff]
    %v349 = vld [vmem:[%s3 + $0x30] sm:$0xff]
    %v350 = vld [vmem:[%s3 + $0x38] sm:$0xff]
    %v351 = vld [vmem:[%s3 + $0x40] sm:$0xff]
    %v352 = vld [vmem:[%s3 + $0x48] sm:$0xff]
    %v353 = vld [vmem:[%s3 + $0x50] sm:$0xff]
    %v354 = vld [vmem:[%s3 + $0x58] sm:$0xff]
    %v355 = vld [vmem:[%s3 + $0x60] sm:$0xff]
    %v356 = vld [vmem:[%s3 + $0x68] sm:$0xff]
    %v357 = vld [vmem:[%s3 + $0x70] sm:$0xff]
    %v358 = vld [vmem:[%s3 + $0x78] sm:$0xff]
    %vm359 = vcmp.eq.s32.totalorder %v309, %v326
    %vm360 = vcmp.eq.s32.totalorder %v310, %v326
    %vm361 = vcmp.eq.s32.totalorder %v311, %v326
    %vm362 = vcmp.eq.s32.totalorder %v312, %v326
    %vm363 = vcmp.eq.s32.totalorder %v313, %v326
    %vm364 = vcmp.eq.s32.totalorder %v314, %v326
    %vm365 = vcmp.eq.s32.totalorder %v315, %v326
    %vm366 = vcmp.eq.s32.totalorder %v316, %v326
    %vm367 = vcmp.eq.s32.totalorder %v317, %v326
    %vm368 = vcmp.eq.s32.totalorder %v318, %v326
    %vm369 = vcmp.eq.s32.totalorder %v319, %v326
    %vm370 = vcmp.eq.s32.totalorder %v320, %v326
    %vm371 = vcmp.eq.s32.totalorder %v321, %v326
    %vm372 = vcmp.eq.s32.totalorder %v322, %v326
    %vm373 = vcmp.eq.s32.totalorder %v323, %v326
    %vm374 = vcmp.eq.s32.totalorder %v324, %v326
    %376 = vset.pattern.permute.xlu0 0
    %377 = vperm.xlu0 %376, %v327
    %v378 = vpop.permute.xlu0 %377
    %381 = vset.pattern.permute.xlu0 0
    %382 = vperm.xlu0 %381, %v328
    %v383 = vpop.permute.xlu0 %382
    %386 = vset.pattern.permute.xlu0 0
    %387 = vperm.xlu0 %386, %v329
    %v388 = vpop.permute.xlu0 %387
    %391 = vset.pattern.permute.xlu0 0
    %392 = vperm.xlu0 %391, %v330
    %v393 = vpop.permute.xlu0 %392
    %396 = vset.pattern.permute.xlu0 0
    %397 = vperm.xlu0 %396, %v331
    %v398 = vpop.permute.xlu0 %397
    %401 = vset.pattern.permute.xlu0 0
    %402 = vperm.xlu0 %401, %v332
    %v403 = vpop.permute.xlu0 %402
    %406 = vset.pattern.permute.xlu0 0
    %407 = vperm.xlu0 %406, %v333
    %v408 = vpop.permute.xlu0 %407
    %411 = vset.pattern.permute.xlu0 0
    %412 = vperm.xlu0 %411, %v334
    %v413 = vpop.permute.xlu0 %412
    %416 = vset.pattern.permute.xlu0 0
    %417 = vperm.xlu0 %416, %v335
    %v418 = vpop.permute.xlu0 %417
    %421 = vset.pattern.permute.xlu0 0
    %422 = vperm.xlu0 %421, %v336
    %v423 = vpop.permute.xlu0 %422
    %426 = vset.pattern.permute.xlu0 0
    %427 = vperm.xlu0 %426, %v337
    %v428 = vpop.permute.xlu0 %427
    %431 = vset.pattern.permute.xlu0 0
    %432 = vperm.xlu0 %431, %v338
    %v433 = vpop.permute.xlu0 %432
    %436 = vset.pattern.permute.xlu0 0
    %437 = vperm.xlu0 %436, %v339
    %v438 = vpop.permute.xlu0 %437
    %441 = vset.pattern.permute.xlu0 0
    %442 = vperm.xlu0 %441, %v340
    %v443 = vpop.permute.xlu0 %442
    %446 = vset.pattern.permute.xlu0 0
    %447 = vperm.xlu0 %446, %v341
    %v448 = vpop.permute.xlu0 %447
    %451 = vset.pattern.permute.xlu0 0
    %452 = vperm.xlu0 %451, %v342
    %v453 = vpop.permute.xlu0 %452
    %v455 = vsel %vm359, %v378, 0.0
    %v456 = vsel %vm360, %v383, 0.0
    %v457 = vsel %vm361, %v388, 0.0
    %v458 = vsel %vm362, %v393, 0.0
    %v459 = vsel %vm363, %v398, 0.0
    %v460 = vsel %vm364, %v403, 0.0
    %v461 = vsel %vm365, %v408, 0.0
    %v462 = vsel %vm366, %v413, 0.0
    %v463 = vsel %vm367, %v418, 0.0
    %v464 = vsel %vm368, %v423, 0.0
    %v465 = vsel %vm369, %v428, 0.0
    %v466 = vsel %vm370, %v433, 0.0
    %v467 = vsel %vm371, %v438, 0.0
    %v468 = vsel %vm372, %v443, 0.0
    %v469 = vsel %vm373, %v448, 0.0
    %v470 = vsel %vm374, %v453, 0.0
    %v471 = vadd.f32 %v343, %v455
    %v472 = vadd.f32 %v344, %v456
    %v473 = vadd.f32 %v345, %v457
    %v474 = vadd.f32 %v346, %v458
    %v475 = vadd.f32 %v347, %v459
    %v476 = vadd.f32 %v348, %v460
    %v477 = vadd.f32 %v349, %v461
    %v478 = vadd.f32 %v350, %v462
    %v479 = vadd.f32 %v351, %v463
    %v480 = vadd.f32 %v352, %v464
    %v481 = vadd.f32 %v353, %v465
    %v482 = vadd.f32 %v354, %v466
    %v483 = vadd.f32 %v355, %v467
    %v484 = vadd.f32 %v356, %v468
    %v485 = vadd.f32 %v357, %v469
    %v486 = vadd.f32 %v358, %v470
    %487 = vst [vmem:[%s3] sm:$0xff] %v471
    %488 = vst [vmem:[%s3 + $0x8] sm:$0xff] %v472
    %489 = vst [vmem:[%s3 + $0x10] sm:$0xff] %v473
    %490 = vst [vmem:[%s3 + $0x18] sm:$0xff] %v474
    %491 = vst [vmem:[%s3 + $0x20] sm:$0xff] %v475
    %492 = vst [vmem:[%s3 + $0x28] sm:$0xff] %v476
    %493 = vst [vmem:[%s3 + $0x30] sm:$0xff] %v477
    %494 = vst [vmem:[%s3 + $0x38] sm:$0xff] %v478
    %495 = vst [vmem:[%s3 + $0x40] sm:$0xff] %v479
    %496 = vst [vmem:[%s3 + $0x48] sm:$0xff] %v480
    %497 = vst [vmem:[%s3 + $0x50] sm:$0xff] %v481
    %498 = vst [vmem:[%s3 + $0x58] sm:$0xff] %v482
    %499 = vst [vmem:[%s3 + $0x60] sm:$0xff] %v483
    %500 = vst [vmem:[%s3 + $0x68] sm:$0xff] %v484
    %501 = vst [vmem:[%s3 + $0x70] sm:$0xff] %v485
    %502 = vst [vmem:[%s3 + $0x78] sm:$0xff] %v486
  $region17: #{fa_decomposition_forward.1} parent=0 // pred_fallthru
    _
  // Predicated region
  $region18: #{fa_decomposition_forward.1} parent=0 // pred_check
    _
  $region19: #{fa_decomposition_forward.1} parent=0 // pred_check_branch
    %504 = sbr.rel (0) target = $region21
  $region20: #{fa_decomposition_forward.1} parent=0 // pred_region
    _
  $region21: #{fa_decomposition_forward.1} parent=0 // pred_fallthru
    _
  // Predicated region
  $region22: #{fa_decomposition_forward.1} parent=0 // pred_check
    _
  $region23: #{fa_decomposition_forward.1} parent=0 // pred_check_branch
    %506 = sbr.rel (0) target = $region25
  $region24: #{fa_decomposition_forward.1} parent=0 // pred_region
    _
  $region25: #{fa_decomposition_forward.1} parent=0 // pred_fallthru
    _

</llo_original>
